<compile_context>
chip_gen: v5e
topology: v5e:2x2
jax: 0.10.0
libtpu: 0.0.40
codegen_flags: <defaults>
</compile_context>

<pallas_src>
import jax
import jax.numpy as jnp
from jax import lax
from jax.experimental import pallas as pl
from jax.experimental.pallas import tpu as pltpu

# ---------------- "args" (small, deterministic config) ----------------
P_MAX = 1.0                 # args.P_max
R_MIN = 0.5                 # args.r_min
NORMALIZED_MU = 1.0         # args.normalize_mu == False -> 1
HIDDEN = 32                 # args.primal_hidden_size
NUM_SUBLAYERS = 2           # args.primal_num_sublayers -> features [2, 32, 32]
NUM_BLOCKS = 3              # args.primal_num_blocks
N_PER_GRAPH = 8             # args.n
NUM_GRAPHS = 2              # args.batch_size * args.num_samplers
CLAMP_MIN = 1e-5
CONSTRAINT_EPS = 0.05
LANES = 128                 # TPU lane width
TILE_N = 256                # lane tile (multiple of 256 for v6e/v7x MXU)


def _round_up(x, m):
    return -(-x // m) * m


def pad_nodes_to_lanes(x_col, n_pad):
    """[n, 1] torch column -> [1, n_pad] lane-dense row (zero padded)."""
    n = x_col.shape[0]
    return jnp.pad(x_col[:, 0][None, :].astype(jnp.float32),
                   ((0, 0), (0, n_pad - n)))


def slab_to_outputs_list(out_slab, n_nodes):
    """Torch-style view (list of [n,1]); validation / interop only."""
    return [out_slab[i, :n_nodes][:, None] for i in range(out_slab.shape[0])]


# ============ fused unrolled forward: all blocks, one pallas_call ============
def primal_model_forward(mu_row, stacked_params, n_nodes,
                         edge_index_l=None, edge_weight_l=None,
                         transmitters_index=None):
    """Unrolled PrimalModel.forward.

    mu_row: [1, n_pad] lane-dense (n_pad multiple of TILE_N).
    Returns lane-dense slab [NUM_BLOCKS+1, n_pad]; row i == p_i, padded lanes
    zeroed so the slab can be reduced over the node axis directly."""
    del edge_index_l, edge_weight_l, transmitters_index  # TODO(synk): see header
    w1t_bf16, cols = stacked_params
    n_pad = mu_row.shape[1]
    assert n_pad % TILE_N == 0
    num_tiles = n_pad // TILE_N

    def kernel(mu_ref, w1t_ref, cols_ref, out_ref):
        lane = (lax.broadcasted_iota(jnp.int32, (1, TILE_N), 1)
                + pl.program_id(0) * TILE_N)
        valid = lane < n_nodes                              # [1, T]

        mu_t = mu_ref[...]                                  # [1, T]
        if NORMALIZED_MU != 1.0:                            # trace-time guard
            mu_t = mu_t * (1.0 / NORMALIZED_MU)

        p = jnp.zeros_like(mu_t)
        rows = [p]                                          # outputs_list[0] = 0
        for b in range(NUM_BLOCKS):                         # static unroll
            c = cols_ref[b]                                 # [H, 8] packed columns
            w0p, w0m = c[:, 0:1], c[:, 1:2]
            b0, b1 = c[:, 2:3], c[:, 3:4]
            w2c, b2 = c[:, 4:5], c[0:1, 5:6]
            # sublayer 0 ([2 -> H]): VPU broadcast-FMA on x = cat(p, mu)
            h = jnp.maximum(w0p * p + w0m * mu_t + b0, 0.0)         # [H, T]
            # sublayer 1 ([H -> H]): bf16 MXU, f32 accumulate
            h = jnp.dot(w1t_ref[b], h.astype(jnp.bfloat16),
                        preferred_element_type=jnp.float32) + b1
            h = jnp.maximum(h, 0.0)
            # readout ([H -> 1], activation=None): VPU mult + sublane reduce
            div_p = jnp.sum(w2c * h, axis=0, keepdims=True) + b2    # [1, T]
            # p = clamp(P_max * sigmoid(p + div_p), min=1e-5); EUP exp + rcp
            z = p + div_p
            p = P_MAX * pl.reciprocal(1.0 + jnp.exp(-z), approx=True)
            p = jnp.maximum(p, CLAMP_MIN)
            rows.append(p)

        # one full-tile unmasked lane-dense store; zero padded lanes so the
        # slab is safe to reduce over the node axis downstream (loss kernel).
        out_ref[...] = jnp.where(valid, jnp.concatenate(rows, axis=0), 0.0)

    flops = n_pad * NUM_BLOCKS * (2 * HIDDEN * HIDDEN + 10 * HIDDEN + 16)
    bytes_accessed = (4 * n_pad * (NUM_BLOCKS + 2)
                      + 2 * w1t_bf16.size + 4 * cols.size)
    return pl.pallas_call(
        kernel,
        grid=(num_tiles,),
        in_specs=[
            pl.BlockSpec((1, TILE_N), lambda i: (0, i)),
            pl.BlockSpec((NUM_BLOCKS, HIDDEN, HIDDEN), lambda i: (0, 0, 0)),
            pl.BlockSpec((NUM_BLOCKS, HIDDEN, 8), lambda i: (0, 0, 0)),
        ],
        out_specs=pl.BlockSpec((NUM_BLOCKS + 1, TILE_N), lambda i: (0, i)),
        out_shape=jax.ShapeDtypeStruct((NUM_BLOCKS + 1, n_pad), jnp.float32),
        compiler_params=pltpu.CompilerParams(
            dimension_semantics=("parallel",),        # megacore on v7x
            vmem_limit_bytes=32 * 1024 * 1024),
        cost_estimate=pl.CostEstimate(
            flops=int(flops),
            transcendentals=int(2 * NUM_BLOCKS * n_pad),
            bytes_accessed=int(bytes_accessed)),
    )(mu_row, w1t_bf16, cols)


# ============ fused loss: lagrangian + descending_constraints + means ============
def primal_model_loss(rates_slab, mu_row, n_nodes, num_graphs, constraint_eps):
    """loss() list-branch (metric='rates'), fully fused in one pallas_call.
    rates_slab: [NUM_BLOCKS+1, n_pad] lane-dense (same layout as forward slab).
    Returns (L scalar, constrained [NUM_BLOCKS])."""
    num_out, n_pad = rates_slab.shape
    inv_g = 1.0 / float(num_graphs)
    one_minus_eps = 1.0 - float(constraint_eps)

    def kernel(rates_ref, mu_ref, out_ref):
        lane = lax.broadcasted_iota(jnp.int32, (1, n_pad), 1)
        valid = lane < n_nodes
        rates = rates_ref[...]                              # [O, n_pad]
        mu_t = mu_ref[...]                                  # [1, n_pad]
        # lagrangian (metric='rates'): -sum(rates) + sum(mu * (r_min - rates))
        #   per-node term: -(1 + mu) * rates + r_min * mu
        # mean over graphs is linear in the per-graph sums and the graphs
        # partition the valid lanes -> one masked lane reduction / num_graphs.
        t = jnp.where(valid, -(1.0 + mu_t) * rates + R_MIN * mu_t, 0.0)
        lbar = jnp.sum(t, axis=1, keepdims=True) * inv_g            # [O, 1]
        constrained = lbar[1:] - one_minus_eps * lbar[:-1]           # [O-1, 1]
        col = jnp.concatenate([lbar[num_out - 1:num_out], constrained], axis=0)
        # lane-dense padded output (sliced once on host): [O, 128]
        out_lane = lax.broadcasted_iota(jnp.int32, (num_out, LANES), 1)
        out_ref[...] = jnp.where(out_lane == 0, col, 0.0)

    out = pl.pallas_call(
        kernel,
        grid=(1,),
        in_specs=[
            pl.BlockSpec((num_out, n_pad), lambda i: (0, 0)),
            pl.BlockSpec((1, n_pad), lambda i: (0, 0)),
        ],
        out_specs=pl.BlockSpec((num_out, LANES), lambda i: (0, 0)),
        out_shape=jax.ShapeDtypeStruct((num_out, LANES), jnp.float32),
        compiler_params=pltpu.CompilerParams(dimension_semantics=("arbitrary",)),
        cost_estimate=pl.CostEstimate(
            flops=int(6 * num_out * n_pad),
            transcendentals=0,
            bytes_accessed=int(4 * (num_out + 1) * n_pad + 4 * num_out * LANES)),
    )(rates_slab, mu_row)

    L = out[0, 0]
    constrained = out[1:num_out, 0]
    return L, constrained


# ====================== parameter construction ======================
def init_block_params(key):
    """Deterministic per-block MLP params, features [2, H, H] + readout to 1."""
    k0, k1, k2 = jax.random.split(key, 3)
    s0 = 1.0 / jnp.sqrt(2.0)
    s1 = 1.0 / jnp.sqrt(float(HIDDEN))
    w0 = jax.random.normal(k0, (2, HIDDEN), jnp.float32) * s0
    b0 = jnp.zeros((1, HIDDEN), jnp.float32)
    w1 = jax.random.normal(k1, (HIDDEN, HIDDEN), jnp.float32) * s1
    b1 = jnp.zeros((1, HIDDEN), jnp.float32)
    w2 = jax.random.normal(k2, (HIDDEN, 1), jnp.float32) * s1
    b2 = jnp.zeros((1, 1), jnp.float32)
    return (w0, b0, w1, b1, w2, b2)


def stack_block_params(block_params):
    """Stack per-block params into kernel layouts (done once on host)."""
    w0s, b0s, w1s, b1s, w2s, b2s = zip(*block_params)
    # Transposed hidden weights as the bf16 MXU operand: h_new = w1t @ h.
    w1t = jnp.stack([w.T for w in w1s]).astype(jnp.bfloat16)        # [B, H, H]
    # All width-1 columns packed into one [B, H, 8] slab (one DMA, no per-use
    # tiny (8,128) tiles):  0=w0p 1=w0m 2=b0 3=b1 4=w2c 5=b2 (bcast over H).
    cols = jnp.zeros((NUM_BLOCKS, HIDDEN, 8), jnp.float32)
    cols = cols.at[:, :, 0].set(jnp.stack([w[0, :] for w in w0s]))
    cols = cols.at[:, :, 1].set(jnp.stack([w[1, :] for w in w0s]))
    cols = cols.at[:, :, 2].set(jnp.stack([b.reshape(HIDDEN) for b in b0s]))
    cols = cols.at[:, :, 3].set(jnp.stack([b.reshape(HIDDEN) for b in b1s]))
    cols = cols.at[:, :, 4].set(jnp.stack([w.reshape(HIDDEN) for w in w2s]))
    cols = cols.at[:, :, 5].set(jnp.stack(
        [jnp.broadcast_to(b.reshape(()), (HIDDEN,)) for b in b2s]))
    return w1t, cols


# ====================== pure-JAX references (validation) ======================
def _forward_ref(mu, block_params):
    """Reference matching the kernel's bf16-MXU cast (f32 accumulation)."""
    mu_n = mu / NORMALIZED_MU if NORMALIZED_MU != 1.0 else mu
    p = jnp.zeros_like(mu)
    outs = [p]
    for (w0, b0, w1, b1, w2, b2) in block_params:
        x = jnp.concatenate([p, mu_n], axis=1)
        h = jnp.maximum(x @ w0 + b0, 0.0)
        h = jnp.dot(h.astype(jnp.bfloat16), w1.astype(jnp.bfloat16),
                    preferred_element_type=jnp.float32) + b1
        h = jnp.maximum(h, 0.0)
        div_p = h @ w2 + b2
        p = jnp.maximum(P_MAX * jax.nn.sigmoid(p + div_p), CLAMP_MIN)
        outs.append(p)
    return outs


def _loss_ref(rates_list, mu, eps):
    g = mu.shape[0] // N_PER_GRAPH
    mu_g = mu.reshape(g, N_PER_GRAPH)
    lag = jnp.stack([-jnp.sum(r.reshape(g, N_PER_GRAPH), axis=1)
                     + jnp.sum(mu_g * (R_MIN - r.reshape(g, N_PER_GRAPH)), axis=1)
                     for r in rates_list])
    return lag[-1].mean(), (lag[1:] - (1.0 - eps) * lag[:-1]).mean(-1)


# ====================== demo ======================
if __name__ == "__main__":
    key = jax.random.PRNGKey(0)
    k_mu, k_rates, k_par = jax.random.split(key, 3)

    n_nodes = NUM_GRAPHS * N_PER_GRAPH                       # 16
    n_pad = _round_up(max(n_nodes, TILE_N), TILE_N)
    mu = jax.random.uniform(k_mu, (n_nodes, 1), jnp.float32)
    mu_row = pad_nodes_to_lanes(mu, n_pad)                   # padded ONCE

    # dummy graph connectivity (unused by the per-node MLP blocks; see TODO)
    edge_index_l = jnp.stack([jnp.arange(n_nodes), jnp.roll(jnp.arange(n_nodes), 1)])
    edge_weight_l = jnp.ones((n_nodes,), jnp.float32)
    transmitters_index = jnp.arange(n_nodes)

    block_keys = jax.random.split(k_par, NUM_BLOCKS)
    block_params = [init_block_params(block_keys[i]) for i in range(NUM_BLOCKS)]
    stacked_params = stack_block_params(block_params)

    # fused forward: lane-dense slab of all NUM_BLOCKS+1 power allocations
    out_slab = primal_model_forward(mu_row, stacked_params, n_nodes,
                                    edge_index_l, edge_weight_l,
                                    transmitters_index)

    # synthetic per-output rates (calc_rates out of scope), computed directly on
    # the lane-dense slab -- no per-output slice / stack between the kernels.
    rate_noise_row = pad_nodes_to_lanes(
        jax.random.uniform(k_rates, (n_nodes, 1), jnp.float32), n_pad)
    rates_slab = jnp.log1p(out_slab * rate_noise_row + 0.1)

    L, constrained = primal_model_loss(rates_slab, mu_row, n_nodes,
                                       NUM_GRAPHS, CONSTRAINT_EPS)

    jax.block_until_ready((out_slab, L, constrained))

    # ---------- shape / semantics checks (validation path only) ----------
    outputs_list = slab_to_outputs_list(out_slab, n_nodes)
    assert len(outputs_list) == NUM_BLOCKS + 1
    assert outputs_list[-1].shape == (n_nodes, 1)
    assert constrained.shape == (NUM_BLOCKS,)
    # padded lanes are zeroed in-kernel (safe for downstream node-axis sums)
    assert float(jnp.max(jnp.abs(out_slab[:, n_nodes:]))) == 0.0

    ref_outs = _forward_ref(mu, block_params)
    for got, want in zip(outputs_list, ref_outs):
        # tolerance covers bf16 MXU accumulation-order + approx EUP reciprocal
        assert float(jnp.max(jnp.abs(got - want))) < 2e-2

    rates_list = [rates_slab[i, :n_nodes][:, None] for i in range(NUM_BLOCKS + 1)]
    ref_L, ref_c = _loss_ref(rates_list, mu, CONSTRAINT_EPS)
    assert float(jnp.abs(L - ref_L)) < 1e-3
    assert float(jnp.max(jnp.abs(constrained - ref_c))) < 1e-3

    print("KERNEL_OK")
</pallas_src>

<mosaic_0001>
module attributes {stable_mosaic.version = 11 : i64} {
  func.func @kernel(%arg0: i32, %arg1: memref<1x256xf32, #tpu.memory_space<vmem>>, %arg2: memref<3x32x32xbf16, #tpu.memory_space<vmem>>, %arg3: memref<3x32x8xf32, #tpu.memory_space<vmem>>, %arg4: memref<4x256xf32, #tpu.memory_space<vmem>>) attributes {dimension_semantics = [#tpu.dimension_semantics<parallel>], iteration_bounds = array<i64: 1>, scalar_prefetch = 0 : i64, scratch_operands = 0 : i64, tpu.core_type = #tpu.core_type<tc>, window_params = [{transform_indices = @transform_0, window_bounds = array<i64: 1, 256>}, {pipeline_mode = #tpu.pipeline_mode<synchronous>, transform_indices = @transform_1, window_bounds = array<i64: 3, 32, 32>}, {pipeline_mode = #tpu.pipeline_mode<synchronous>, transform_indices = @transform_2, window_bounds = array<i64: 3, 32, 8>}, {transform_indices = @transform_3, window_bounds = array<i64: 4, 256>}]} {
    %0 = tpu.iota {dimensions = array<i32: 1>} : vector<1x256xi32>
    %c256_i32 = arith.constant 256 : i32
    %1 = arith.muli %arg0, %c256_i32 : i32
    %2 = vector.broadcast %1 : i32 to vector<1x256xi32>
    %3 = arith.addi %0, %2 : vector<1x256xi32>
    %c16_i32 = arith.constant 16 : i32
    %4 = vector.broadcast %c16_i32 : i32 to vector<1x256xi32>
    %5 = arith.cmpi slt, %3, %4 : vector<1x256xi32>
    %c0 = arith.constant 0 : index
    %c0_0 = arith.constant 0 : index
    %6 = vector.load %arg1[%c0, %c0_0] : memref<1x256xf32, #tpu.memory_space<vmem>>, vector<1x256xf32>
    %cst = arith.constant 0.000000e+00 : f32
    %7 = vector.broadcast %cst : f32 to vector<1x256xf32>
    %c0_1 = arith.constant 0 : index
    %c0_2 = arith.constant 0 : index
    %c0_3 = arith.constant 0 : index
    %8 = vector.load %arg3[%c0_1, %c0_2, %c0_3] : memref<3x32x8xf32, #tpu.memory_space<vmem>>, vector<1x32x8xf32>
    %9 = vector.shape_cast %8 : vector<1x32x8xf32> to vector<32x8xf32>
    %10 = vector.extract_strided_slice %9 {offsets = [0, 0], sizes = [32, 1], strides = [1, 1]} : vector<32x8xf32> to vector<32x1xf32>
    %11 = vector.extract_strided_slice %9 {offsets = [0, 1], sizes = [32, 1], strides = [1, 1]} : vector<32x8xf32> to vector<32x1xf32>
    %12 = vector.extract_strided_slice %9 {offsets = [0, 2], sizes = [32, 1], strides = [1, 1]} : vector<32x8xf32> to vector<32x1xf32>
    %13 = vector.extract_strided_slice %9 {offsets = [0, 3], sizes = [32, 1], strides = [1, 1]} : vector<32x8xf32> to vector<32x1xf32>
    %14 = vector.extract_strided_slice %9 {offsets = [0, 4], sizes = [32, 1], strides = [1, 1]} : vector<32x8xf32> to vector<32x1xf32>
    %15 = vector.extract_strided_slice %9 {offsets = [0, 5], sizes = [1, 1], strides = [1, 1]} : vector<32x8xf32> to vector<1x1xf32>
    %16 = vector.broadcast %10 : vector<32x1xf32> to vector<32x256xf32>
    %17 = vector.broadcast %7 : vector<1x256xf32> to vector<32x256xf32>
    %18 = arith.mulf %16, %17 : vector<32x256xf32>
    %19 = vector.broadcast %11 : vector<32x1xf32> to vector<32x256xf32>
    %20 = vector.broadcast %6 : vector<1x256xf32> to vector<32x256xf32>
    %21 = arith.mulf %19, %20 : vector<32x256xf32>
    %22 = arith.addf %18, %21 : vector<32x256xf32>
    %23 = vector.broadcast %12 : vector<32x1xf32> to vector<32x256xf32>
    %24 = arith.addf %22, %23 : vector<32x256xf32>
    %cst_4 = arith.constant 0.000000e+00 : f32
    %25 = vector.broadcast %cst_4 : f32 to vector<32x256xf32>
    %26 = arith.maximumf %24, %25 : vector<32x256xf32>
    %c0_5 = arith.constant 0 : index
    %c0_6 = arith.constant 0 : index
    %c0_7 = arith.constant 0 : index
    %27 = vector.load %arg2[%c0_5, %c0_6, %c0_7] : memref<3x32x32xbf16, #tpu.memory_space<vmem>>, vector<1x32x32xbf16>
    %28 = vector.shape_cast %27 : vector<1x32x32xbf16> to vector<32x32xbf16>
    %29 = arith.truncf %26 : vector<32x256xf32> to vector<32x256xbf16>
    %cst_8 = arith.constant dense<0.000000e+00> : vector<32x256xf32>
    %30 = tpu.matmul %28, %29, %cst_8 {dimension_numbers = #tpu.dot_dimension_numbers<[1], [0], [0], [1], [0, 0, 1, 1], [], []>} : vector<32x32xbf16>, vector<32x256xbf16>, vector<32x256xf32> -> vector<32x256xf32>
    %31 = vector.broadcast %13 : vector<32x1xf32> to vector<32x256xf32>
    %32 = arith.addf %30, %31 : vector<32x256xf32>
    %cst_9 = arith.constant 0.000000e+00 : f32
    %33 = vector.broadcast %cst_9 : f32 to vector<32x256xf32>
    %34 = arith.maximumf %32, %33 : vector<32x256xf32>
    %35 = vector.broadcast %14 : vector<32x1xf32> to vector<32x256xf32>
    %36 = arith.mulf %35, %34 : vector<32x256xf32>
    %cst_10 = arith.constant dense<0.000000e+00> : vector<256xf32>
    %37 = vector.multi_reduction <add>, %36, %cst_10 [0] : vector<32x256xf32> to vector<256xf32>
    %38 = vector.shape_cast %37 : vector<256xf32> to vector<1x256xf32>
    %39 = vector.broadcast %15 : vector<1x1xf32> to vector<1x256xf32>
    %40 = arith.addf %38, %39 : vector<1x256xf32>
    %41 = arith.addf %7, %40 : vector<1x256xf32>
    %cst_11 = arith.constant 0.000000e+00 : f32
    %42 = vector.broadcast %cst_11 : f32 to vector<1x256xf32>
    %43 = arith.subf %42, %41 : vector<1x256xf32>
    %44 = math.exp %43 : vector<1x256xf32>
    %cst_12 = arith.constant 1.000000e+00 : f32
    %45 = vector.broadcast %cst_12 : f32 to vector<1x256xf32>
    %46 = arith.addf %45, %44 : vector<1x256xf32>
    %47 = tpu.reciprocal %46 {approx = true} : vector<1x256xf32> -> vector<1x256xf32>
    %cst_13 = arith.constant 1.000000e+00 : f32
    %48 = vector.broadcast %cst_13 : f32 to vector<1x256xf32>
    %49 = arith.mulf %48, %47 : vector<1x256xf32>
    %cst_14 = arith.constant 9.99999974E-6 : f32
    %50 = vector.broadcast %cst_14 : f32 to vector<1x256xf32>
    %51 = arith.maximumf %49, %50 : vector<1x256xf32>
    %c1 = arith.constant 1 : index
    %c0_15 = arith.constant 0 : index
    %c0_16 = arith.constant 0 : index
    %52 = vector.load %arg3[%c1, %c0_15, %c0_16] : memref<3x32x8xf32, #tpu.memory_space<vmem>>, vector<1x32x8xf32>
    %53 = vector.shape_cast %52 : vector<1x32x8xf32> to vector<32x8xf32>
    %54 = vector.extract_strided_slice %53 {offsets = [0, 0], sizes = [32, 1], strides = [1, 1]} : vector<32x8xf32> to vector<32x1xf32>
    %55 = vector.extract_strided_slice %53 {offsets = [0, 1], sizes = [32, 1], strides = [1, 1]} : vector<32x8xf32> to vector<32x1xf32>
    %56 = vector.extract_strided_slice %53 {offsets = [0, 2], sizes = [32, 1], strides = [1, 1]} : vector<32x8xf32> to vector<32x1xf32>
    %57 = vector.extract_strided_slice %53 {offsets = [0, 3], sizes = [32, 1], strides = [1, 1]} : vector<32x8xf32> to vector<32x1xf32>
    %58 = vector.extract_strided_slice %53 {offsets = [0, 4], sizes = [32, 1], strides = [1, 1]} : vector<32x8xf32> to vector<32x1xf32>
    %59 = vector.extract_strided_slice %53 {offsets = [0, 5], sizes = [1, 1], strides = [1, 1]} : vector<32x8xf32> to vector<1x1xf32>
    %60 = vector.broadcast %54 : vector<32x1xf32> to vector<32x256xf32>
    %61 = vector.broadcast %51 : vector<1x256xf32> to vector<32x256xf32>
    %62 = arith.mulf %60, %61 : vector<32x256xf32>
    %63 = vector.broadcast %55 : vector<32x1xf32> to vector<32x256xf32>
    %64 = vector.broadcast %6 : vector<1x256xf32> to vector<32x256xf32>
    %65 = arith.mulf %63, %64 : vector<32x256xf32>
    %66 = arith.addf %62, %65 : vector<32x256xf32>
    %67 = vector.broadcast %56 : vector<32x1xf32> to vector<32x256xf32>
    %68 = arith.addf %66, %67 : vector<32x256xf32>
    %cst_17 = arith.constant 0.000000e+00 : f32
    %69 = vector.broadcast %cst_17 : f32 to vector<32x256xf32>
    %70 = arith.maximumf %68, %69 : vector<32x256xf32>
    %c1_18 = arith.constant 1 : index
    %c0_19 = arith.constant 0 : index
    %c0_20 = arith.constant 0 : index
    %71 = vector.load %arg2[%c1_18, %c0_19, %c0_20] : memref<3x32x32xbf16, #tpu.memory_space<vmem>>, vector<1x32x32xbf16>
    %72 = vector.shape_cast %71 : vector<1x32x32xbf16> to vector<32x32xbf16>
    %73 = arith.truncf %70 : vector<32x256xf32> to vector<32x256xbf16>
    %cst_21 = arith.constant dense<0.000000e+00> : vector<32x256xf32>
    %74 = tpu.matmul %72, %73, %cst_21 {dimension_numbers = #tpu.dot_dimension_numbers<[1], [0], [0], [1], [0, 0, 1, 1], [], []>} : vector<32x32xbf16>, vector<32x256xbf16>, vector<32x256xf32> -> vector<32x256xf32>
    %75 = vector.broadcast %57 : vector<32x1xf32> to vector<32x256xf32>
    %76 = arith.addf %74, %75 : vector<32x256xf32>
    %cst_22 = arith.constant 0.000000e+00 : f32
    %77 = vector.broadcast %cst_22 : f32 to vector<32x256xf32>
    %78 = arith.maximumf %76, %77 : vector<32x256xf32>
    %79 = vector.broadcast %58 : vector<32x1xf32> to vector<32x256xf32>
    %80 = arith.mulf %79, %78 : vector<32x256xf32>
    %cst_23 = arith.constant dense<0.000000e+00> : vector<256xf32>
    %81 = vector.multi_reduction <add>, %80, %cst_23 [0] : vector<32x256xf32> to vector<256xf32>
    %82 = vector.shape_cast %81 : vector<256xf32> to vector<1x256xf32>
    %83 = vector.broadcast %59 : vector<1x1xf32> to vector<1x256xf32>
    %84 = arith.addf %82, %83 : vector<1x256xf32>
    %85 = arith.addf %51, %84 : vector<1x256xf32>
    %cst_24 = arith.constant 0.000000e+00 : f32
    %86 = vector.broadcast %cst_24 : f32 to vector<1x256xf32>
    %87 = arith.subf %86, %85 : vector<1x256xf32>
    %88 = math.exp %87 : vector<1x256xf32>
    %cst_25 = arith.constant 1.000000e+00 : f32
    %89 = vector.broadcast %cst_25 : f32 to vector<1x256xf32>
    %90 = arith.addf %89, %88 : vector<1x256xf32>
    %91 = tpu.reciprocal %90 {approx = true} : vector<1x256xf32> -> vector<1x256xf32>
    %cst_26 = arith.constant 1.000000e+00 : f32
    %92 = vector.broadcast %cst_26 : f32 to vector<1x256xf32>
    %93 = arith.mulf %92, %91 : vector<1x256xf32>
    %cst_27 = arith.constant 9.99999974E-6 : f32
    %94 = vector.broadcast %cst_27 : f32 to vector<1x256xf32>
    %95 = arith.maximumf %93, %94 : vector<1x256xf32>
    %c2 = arith.constant 2 : index
    %c0_28 = arith.constant 0 : index
    %c0_29 = arith.constant 0 : index
    %96 = vector.load %arg3[%c2, %c0_28, %c0_29] : memref<3x32x8xf32, #tpu.memory_space<vmem>>, vector<1x32x8xf32>
    %97 = vector.shape_cast %96 : vector<1x32x8xf32> to vector<32x8xf32>
    %98 = vector.extract_strided_slice %97 {offsets = [0, 0], sizes = [32, 1], strides = [1, 1]} : vector<32x8xf32> to vector<32x1xf32>
    %99 = vector.extract_strided_slice %97 {offsets = [0, 1], sizes = [32, 1], strides = [1, 1]} : vector<32x8xf32> to vector<32x1xf32>
    %100 = vector.extract_strided_slice %97 {offsets = [0, 2], sizes = [32, 1], strides = [1, 1]} : vector<32x8xf32> to vector<32x1xf32>
    %101 = vector.extract_strided_slice %97 {offsets = [0, 3], sizes = [32, 1], strides = [1, 1]} : vector<32x8xf32> to vector<32x1xf32>
    %102 = vector.extract_strided_slice %97 {offsets = [0, 4], sizes = [32, 1], strides = [1, 1]} : vector<32x8xf32> to vector<32x1xf32>
    %103 = vector.extract_strided_slice %97 {offsets = [0, 5], sizes = [1, 1], strides = [1, 1]} : vector<32x8xf32> to vector<1x1xf32>
    %104 = vector.broadcast %98 : vector<32x1xf32> to vector<32x256xf32>
    %105 = vector.broadcast %95 : vector<1x256xf32> to vector<32x256xf32>
    %106 = arith.mulf %104, %105 : vector<32x256xf32>
    %107 = vector.broadcast %99 : vector<32x1xf32> to vector<32x256xf32>
    %108 = vector.broadcast %6 : vector<1x256xf32> to vector<32x256xf32>
    %109 = arith.mulf %107, %108 : vector<32x256xf32>
    %110 = arith.addf %106, %109 : vector<32x256xf32>
    %111 = vector.broadcast %100 : vector<32x1xf32> to vector<32x256xf32>
    %112 = arith.addf %110, %111 : vector<32x256xf32>
    %cst_30 = arith.constant 0.000000e+00 : f32
    %113 = vector.broadcast %cst_30 : f32 to vector<32x256xf32>
    %114 = arith.maximumf %112, %113 : vector<32x256xf32>
    %c2_31 = arith.constant 2 : index
    %c0_32 = arith.constant 0 : index
    %c0_33 = arith.constant 0 : index
    %115 = vector.load %arg2[%c2_31, %c0_32, %c0_33] : memref<3x32x32xbf16, #tpu.memory_space<vmem>>, vector<1x32x32xbf16>
    %116 = vector.shape_cast %115 : vector<1x32x32xbf16> to vector<32x32xbf16>
    %117 = arith.truncf %114 : vector<32x256xf32> to vector<32x256xbf16>
    %cst_34 = arith.constant dense<0.000000e+00> : vector<32x256xf32>
    %118 = tpu.matmul %116, %117, %cst_34 {dimension_numbers = #tpu.dot_dimension_numbers<[1], [0], [0], [1], [0, 0, 1, 1], [], []>} : vector<32x32xbf16>, vector<32x256xbf16>, vector<32x256xf32> -> vector<32x256xf32>
    %119 = vector.broadcast %101 : vector<32x1xf32> to vector<32x256xf32>
    %120 = arith.addf %118, %119 : vector<32x256xf32>
    %cst_35 = arith.constant 0.000000e+00 : f32
    %121 = vector.broadcast %cst_35 : f32 to vector<32x256xf32>
    %122 = arith.maximumf %120, %121 : vector<32x256xf32>
    %123 = vector.broadcast %102 : vector<32x1xf32> to vector<32x256xf32>
    %124 = arith.mulf %123, %122 : vector<32x256xf32>
    %cst_36 = arith.constant dense<0.000000e+00> : vector<256xf32>
    %125 = vector.multi_reduction <add>, %124, %cst_36 [0] : vector<32x256xf32> to vector<256xf32>
    %126 = vector.shape_cast %125 : vector<256xf32> to vector<1x256xf32>
    %127 = vector.broadcast %103 : vector<1x1xf32> to vector<1x256xf32>
    %128 = arith.addf %126, %127 : vector<1x256xf32>
    %129 = arith.addf %95, %128 : vector<1x256xf32>
    %cst_37 = arith.constant 0.000000e+00 : f32
    %130 = vector.broadcast %cst_37 : f32 to vector<1x256xf32>
    %131 = arith.subf %130, %129 : vector<1x256xf32>
    %132 = math.exp %131 : vector<1x256xf32>
    %cst_38 = arith.constant 1.000000e+00 : f32
    %133 = vector.broadcast %cst_38 : f32 to vector<1x256xf32>
    %134 = arith.addf %133, %132 : vector<1x256xf32>
    %135 = tpu.reciprocal %134 {approx = true} : vector<1x256xf32> -> vector<1x256xf32>
    %cst_39 = arith.constant 1.000000e+00 : f32
    %136 = vector.broadcast %cst_39 : f32 to vector<1x256xf32>
    %137 = arith.mulf %136, %135 : vector<1x256xf32>
    %cst_40 = arith.constant 9.99999974E-6 : f32
    %138 = vector.broadcast %cst_40 : f32 to vector<1x256xf32>
    %139 = arith.maximumf %137, %138 : vector<1x256xf32>
    %140 = tpu.concatenate %7, %51, %95, %139 in 0 : vector<1x256xf32>, vector<1x256xf32>, vector<1x256xf32>, vector<1x256xf32> -> vector<4x256xf32>
    %cst_41 = arith.constant 0.000000e+00 : f32
    %141 = vector.shape_cast %5 : vector<1x256xi1> to vector<1x256xi1>
    %142 = vector.broadcast %141 : vector<1x256xi1> to vector<4x256xi1>
    %143 = vector.broadcast %cst_41 : f32 to vector<4x256xf32>
    %144 = arith.select %142, %140, %143 : vector<4x256xi1>, vector<4x256xf32>
    %c0_42 = arith.constant 0 : index
    %c0_43 = arith.constant 0 : index
    %145 = vector.load %arg4[%c0_42, %c0_43] : memref<4x256xf32, #tpu.memory_space<vmem>>, vector<4x256xf32>
    tpu.vector_store %arg4[%c0_42, %c0_43], %144 {strides = array<i32>} : memref<4x256xf32, #tpu.memory_space<vmem>>, vector<4x256xf32>,
    return
  }
  func.func @transform_0(%arg0: i32) -> (i32, i32) {
    %c0_i32 = arith.constant 0 : i32
    %c0_i32_0 = arith.constant 0 : i32
    return %c0_i32, %arg0 : i32, i32
  }
  func.func @transform_1(%arg0: i32) -> (i32, i32, i32) {
    %c0_i32 = arith.constant 0 : i32
    %c0_i32_0 = arith.constant 0 : i32
    %c0_i32_1 = arith.constant 0 : i32
    %c0_i32_2 = arith.constant 0 : i32
    return %c0_i32, %c0_i32_0, %c0_i32_1 : i32, i32, i32
  }
  func.func @transform_2(%arg0: i32) -> (i32, i32, i32) {
    %c0_i32 = arith.constant 0 : i32
    %c0_i32_0 = arith.constant 0 : i32
    %c0_i32_1 = arith.constant 0 : i32
    %c0_i32_2 = arith.constant 0 : i32
    return %c0_i32, %c0_i32_0, %c0_i32_1 : i32, i32, i32
  }
  func.func @transform_3(%arg0: i32) -> (i32, i32) {
    %c0_i32 = arith.constant 0 : i32
    %c0_i32_0 = arith.constant 0 : i32
    return %c0_i32, %arg0 : i32, i32
  }
}

</mosaic_0001>

<llo_original>
// kernel: tpu_custom_call.1
$region0: #{tpu_custom_call.1}
  #allocation0 [shape = 'u32[]', space=smem, size = 0x4, offset = 0x4, fixed_abs, tag = 'smem constant byte address 0x4 - core index']
  #allocation1 [shape = 'u32[72,128]{1,0:T(1,128)}', space=vmem, size = 0x9000, scoped, tag = 'internal scratch']
  %s0 = inlined_call_operand.vmem [shape: f32[1,256], index: 0, kind: input, shape index: {}]
  %s1 = inlined_call_operand.vmem [shape: bf16[3,32,32], index: 1, kind: input, shape index: {}]
  %s2 = inlined_call_operand.vmem [shape: f32[3,32,8], index: 2, kind: input, shape index: {}]
  %s3 = inlined_call_operand.hbm [shape: f32[4,256], index: 3, kind: output, shape index: {}]
  %s4 = sld [smem:[#allocation0]]
  $region22: #{tpu_custom_call.1} parent=0
    _
  %s6 = ssub.s32 1, %s4
  %s7 = scalar_select 0, %s6, %s4
  $region1: #{tpu_custom_call.1} parent=0
    #allocation2 [shape = 'u8[4096]{0}', space=vmem, size = 0x1000, scoped, tag = 'output window, operand 0, single buffered']
    #allocation3 [shape = 's32[1]{0}', space=sflag, size = 0x4, scoped, tag = 'scoped memory for tpu_custom_call.1']
    %8 = vsyncpa [#allocation3], 0
    // Predicated region
    $region2: #{tpu_custom_call.1} parent=1 // pred_check
      _
    $region3: #{tpu_custom_call.1} parent=1 // pred_check_branch
      %10 = sbr.rel (0) target = $region5
    $region4: #{tpu_custom_call.1} parent=1 // pred_region
      _
    $region5: #{tpu_custom_call.1} parent=1 // pred_fallthru
      _
    // Predicated region
    $region6: #{tpu_custom_call.1} parent=1 // pred_check
      _
    $region7: #{tpu_custom_call.1} parent=1 // pred_check_branch
      %12 = sbr.rel (0) target = $region9
    $region8: #{tpu_custom_call.1} parent=1 // pred_region
      _
    $region9: #{tpu_custom_call.1} parent=1 // pred_fallthru
      _
    // Predicated region
    $region10: #{tpu_custom_call.1} parent=1 // pred_check
      _
    $region11: #{tpu_custom_call.1} parent=1 // pred_check_branch
      %14 = sbr.rel (0) target = $region13
    $region12: #{tpu_custom_call.1} parent=1 // pred_region
      _
    $region13: #{tpu_custom_call.1} parent=1 // pred_fallthru
      _
    %v16 = vlaneseq
    %v17 = vand.u32 %v16, 127
    %v18 = vadd.s32 %v17, 128
    %s19 = smul.u32 0, 256
    %v20 = vstv %s19
    %v21 = vadd.s32 %v17, %v20
    %v22 = vadd.s32 %v18, %v20
    %vm23 = vcmp.lt.s32.totalorder %v21, 16
    %vm24 = vcmp.lt.s32.totalorder %v22, 16
    %v25 = vld [vmem:[%s0] sm:$0x3]
    %v26 = vld [vmem:[%s2] sm:$0xff]
    %v27 = vld [vmem:[%s2 + $0x8] sm:$0xff]
    %v28 = vld [vmem:[%s2 + $0x10] sm:$0xff]
    %v29 = vld [vmem:[%s2 + $0x18] sm:$0xff]
    %31 = vset.pattern.permute.xlu0 0
    %32 = vperm.xlu0 %31, %v26
    %v33 = vpop.permute.xlu0 %32
    %36 = vset.pattern.permute.xlu0 0
    %37 = vperm.xlu0 %36, %v27
    %v38 = vpop.permute.xlu0 %37
    %41 = vset.pattern.permute.xlu0 0
    %42 = vperm.xlu0 %41, %v28
    %v43 = vpop.permute.xlu0 %42
    %46 = vset.pattern.permute.xlu0 0
    %47 = vperm.xlu0 %46, %v29
    %v48 = vpop.permute.xlu0 %47
    %v50 = vmul.f32 %v33, 0.0
    %v51 = vmul.f32 %v38, 0.0
    %v52 = vmul.f32 %v43, 0.0
    %v53 = vmul.f32 %v48, 0.0
    %54 = vset.pattern.permute.xlu0 1
    %55 = vperm.xlu0 %54, %v26
    %v56 = vpop.permute.xlu0 %55
    %58 = vset.pattern.permute.xlu0 1
    %59 = vperm.xlu0 %58, %v27
    %v60 = vpop.permute.xlu0 %59
    %62 = vset.pattern.permute.xlu0 1
    %63 = vperm.xlu0 %62, %v28
    %v64 = vpop.permute.xlu0 %63
    %66 = vset.pattern.permute.xlu0 1
    %67 = vperm.xlu0 %66, %v29
    %v68 = vpop.permute.xlu0 %67
    %v71 = vperm.slane %v25, 0
    %v72 = vperm.slane %v25, 1
    %v75 = vmul.f32 %v56, %v71
    %v76 = vmul.f32 %v56, %v72
    %v77 = vmul.f32 %v60, %v71
    %v78 = vmul.f32 %v60, %v72
    %v79 = vmul.f32 %v64, %v71
    %v80 = vmul.f32 %v64, %v72
    %v81 = vmul.f32 %v68, %v71
    %v82 = vmul.f32 %v68, %v72
    %v83 = vadd.f32 %v50, %v75
    %v84 = vadd.f32 %v50, %v76
    %v85 = vadd.f32 %v51, %v77
    %v86 = vadd.f32 %v51, %v78
    %v87 = vadd.f32 %v52, %v79
    %v88 = vadd.f32 %v52, %v80
    %v89 = vadd.f32 %v53, %v81
    %v90 = vadd.f32 %v53, %v82
    %91 = vset.pattern.permute.xlu0 2
    %92 = vperm.xlu0 %91, %v26
    %v93 = vpop.permute.xlu0 %92
    %95 = vset.pattern.permute.xlu0 2
    %96 = vperm.xlu0 %95, %v27
    %v97 = vpop.permute.xlu0 %96
    %99 = vset.pattern.permute.xlu0 2
    %100 = vperm.xlu0 %99, %v28
    %v101 = vpop.permute.xlu0 %100
    %103 = vset.pattern.permute.xlu0 2
    %104 = vperm.xlu0 %103, %v29
    %v105 = vpop.permute.xlu0 %104
    %v107 = vadd.f32 %v83, %v93
    %v108 = vadd.f32 %v84, %v93
    %v109 = vadd.f32 %v85, %v97
    %v110 = vadd.f32 %v86, %v97
    %v111 = vadd.f32 %v87, %v101
    %v112 = vadd.f32 %v88, %v101
    %v113 = vadd.f32 %v89, %v105
    %v114 = vadd.f32 %v90, %v105
    %v115 = vmax.f32 %v107, 0.0
    %v116 = vmax.f32 %v108, 0.0
    %v117 = vmax.f32 %v109, 0.0
    %v118 = vmax.f32 %v110, 0.0
    %v119 = vmax.f32 %v111, 0.0
    %v120 = vmax.f32 %v112, 0.0
    %v121 = vmax.f32 %v113, 0.0
    %v122 = vmax.f32 %v114, 0.0
    %v123 = vld [vmem:[%s1] sm:$0xf]
    %v124 = vld [vmem:[%s1 + $0x4] sm:$0xf]
    %v125 = vld [vmem:[%s1 + $0x8] sm:$0xf]
    %v126 = vld [vmem:[%s1 + $0xc] sm:$0xf]
    %v127 = vpack.c.bf16 %v117, %v115
    %v128 = vpack.c.bf16 %v118, %v116
    %v129 = vpack.c.bf16 %v121, %v119
    %v130 = vpack.c.bf16 %v122, %v120
    %131 = vset.pattern.permute.xlu0 3
    %132 = vperm.xlu0 %131, %v26
    %v133 = vpop.permute.xlu0 %132
    %135 = vset.pattern.permute.xlu0 3
    %136 = vperm.xlu0 %135, %v27
    %v137 = vpop.permute.xlu0 %136
    %139 = vset.pattern.permute.xlu0 3
    %140 = vperm.xlu0 %139, %v28
    %v141 = vpop.permute.xlu0 %140
    %143 = vset.pattern.permute.xlu0 3
    %144 = vperm.xlu0 %143, %v29
    %v145 = vpop.permute.xlu0 %144
    %v151 = vunpack.c.l.b16 %v123
    %v152 = vunpack.c.l.b16 %v124
    %v153 = vunpack.c.l.b16 %v125
    %v154 = vunpack.c.l.b16 %v126
    %v155 = vpack.c.b16 %v152, %v151
    %v156 = vpack.c.b16 %v154, %v153
    %vm157 = vcmask 261120
    %v159 = vsel %vm157, %v155, 0
    %v162 = vsel %vm157, %v156, 0
    %164 = vmatpush.bf16.msra.mxu0 0
    %165 = vmatpush.bf16.msra.mxu0 0
    %166 = vmatpush.bf16.msra.mxu0 0
    %167 = vmatpush.bf16.msra.mxu0 0
    %168 = vmatpush.bf16.msra.mxu0 0
    %169 = vmatpush.bf16.msra.mxu0 0
    %170 = vmatpush.bf16.msra.mxu0 %v129
    %171 = vmatpush.bf16.msra.mxu0 %v127
    %172 = vmatmul.bf16.gmra.mxu0 %v159
    %v173 = vpop.f32.mrf.mxu0
    %v174 = vadd.f32 %v133, %v173
    %v175 = vpop.f32.mrf.mxu0
    %v176 = vadd.f32 %v137, %v175
    %177 = vmatmul.bf16.gmra.mxu0 %v162
    %v178 = vpop.f32.mrf.mxu0
    %v179 = vadd.f32 %v141, %v178
    %v180 = vpop.f32.mrf.mxu0
    %v181 = vadd.f32 %v145, %v180
    %182 = vdwg.mxu0
    %183 = vmatpush.bf16.msra.mxu0 0
    %184 = vmatpush.bf16.msra.mxu0 0
    %185 = vmatpush.bf16.msra.mxu0 0
    %186 = vmatpush.bf16.msra.mxu0 0
    %187 = vmatpush.bf16.msra.mxu0 0
    %188 = vmatpush.bf16.msra.mxu0 0
    %189 = vmatpush.bf16.msra.mxu0 %v130
    %190 = vmatpush.bf16.msra.mxu0 %v128
    %191 = vmatmul.bf16.gmra.mxu0 %v159
    %v192 = vpop.f32.mrf.mxu0
    %v193 = vadd.f32 %v133, %v192
    %v194 = vpop.f32.mrf.mxu0
    %v195 = vadd.f32 %v137, %v194
    %196 = vmatmul.bf16.gmra.mxu0 %v162
    %v197 = vpop.f32.mrf.mxu0
    %v198 = vadd.f32 %v141, %v197
    %v199 = vpop.f32.mrf.mxu0
    %v200 = vadd.f32 %v145, %v199
    %201 = vdwg.mxu0
    %v202 = vmax.f32 %v174, 0.0
    %v203 = vmax.f32 %v193, 0.0
    %v204 = vmax.f32 %v176, 0.0
    %v205 = vmax.f32 %v195, 0.0
    %v206 = vmax.f32 %v179, 0.0
    %v207 = vmax.f32 %v198, 0.0
    %v208 = vmax.f32 %v181, 0.0
    %v209 = vmax.f32 %v200, 0.0
    %210 = vset.pattern.permute.xlu0 4
    %211 = vperm.xlu0 %210, %v26
    %v212 = vpop.permute.xlu0 %211
    %214 = vset.pattern.permute.xlu0 4
    %215 = vperm.xlu0 %214, %v27
    %v216 = vpop.permute.xlu0 %215
    %218 = vset.pattern.permute.xlu0 4
    %219 = vperm.xlu0 %218, %v28
    %v220 = vpop.permute.xlu0 %219
    %222 = vset.pattern.permute.xlu0 4
    %223 = vperm.xlu0 %222, %v29
    %v224 = vpop.permute.xlu0 %223
    %v226 = vmul.f32 %v212, %v202
    %v227 = vmul.f32 %v212, %v203
    %v228 = vmul.f32 %v216, %v204
    %v229 = vmul.f32 %v216, %v205
    %v230 = vmul.f32 %v220, %v206
    %v231 = vmul.f32 %v220, %v207
    %v232 = vmul.f32 %v224, %v208
    %v233 = vmul.f32 %v224, %v209
    %v234 = vadd.f32 %v226, %v228
    %v235 = vadd.f32 %v234, %v230
    %v236 = vadd.f32 %v235, %v232
    %v237 = vrot.slane %v236, 4
    %v238 = vadd.f32 %v236, %v237
    %v239 = vrot.slane %v238, 2
    %v240 = vadd.f32 %v238, %v239
    %v241 = vrot.slane %v240, 1
    %v242 = vadd.f32 %v240, %v241
    %v243 = vadd.f32 %v227, %v229
    %v244 = vadd.f32 %v243, %v231
    %v245 = vadd.f32 %v244, %v233
    %v246 = vrot.slane %v245, 4
    %v247 = vadd.f32 %v245, %v246
    %v248 = vrot.slane %v247, 2
    %v249 = vadd.f32 %v247, %v248
    %v250 = vrot.slane %v249, 1
    %v251 = vadd.f32 %v249, %v250
    %252 = vset.pattern.permute.xlu0 5
    %253 = vperm.xlu0 %252, %v26
    %v254 = vpop.permute.xlu0 %253
    %v256 = vadd.f32 %v242, %v254
    %v257 = vadd.f32 %v251, %v254
    %v258 = vadd.f32 %v256, 0.0
    %v259 = vadd.f32 %v257, 0.0
    %v260 = vsub.f32 0.0, %v258
    %v261 = vsub.f32 0.0, %v259
    %v262 = vmul.f32 %v260, 1.442695
    %v263 = vpow.pop %v262
    %v264 = vmul.f32 %v261, 1.442695
    %v265 = vpow.pop %v264
    %v266 = vadd.f32 %v263, 1.0
    %v267 = vadd.f32 %v265, 1.0
    %v268 = vrcp.pop %v266
    %v269 = vrcp.pop %v267
    %v270 = vmax.f32 %v268, 1e-05
    %v271 = vmax.f32 %v269, 1e-05
    %s272 = scalar_lea.vmem %s2, 32
    %v273 = vld [vmem:[%s272] sm:$0xff]
    %v274 = vld [vmem:[%s272 + $0x8] sm:$0xff]
    %v275 = vld [vmem:[%s272 + $0x10] sm:$0xff]
    %v276 = vld [vmem:[%s272 + $0x18] sm:$0xff]
    %278 = vset.pattern.permute.xlu0 0
    %279 = vperm.xlu0 %278, %v273
    %v280 = vpop.permute.xlu0 %279
    %283 = vset.pattern.permute.xlu0 0
    %284 = vperm.xlu0 %283, %v274
    %v285 = vpop.permute.xlu0 %284
    %288 = vset.pattern.permute.xlu0 0
    %289 = vperm.xlu0 %288, %v275
    %v290 = vpop.permute.xlu0 %289
    %293 = vset.pattern.permute.xlu0 0
    %294 = vperm.xlu0 %293, %v276
    %v295 = vpop.permute.xlu0 %294
    %v297 = vperm.slane %v270, 0
    %v298 = vperm.slane %v271, 0
    %v299 = vmul.f32 %v280, %v297
    %v300 = vmul.f32 %v280, %v298
    %v301 = vmul.f32 %v285, %v297
    %v302 = vmul.f32 %v285, %v298
    %v303 = vmul.f32 %v290, %v297
    %v304 = vmul.f32 %v290, %v298
    %v305 = vmul.f32 %v295, %v297
    %v306 = vmul.f32 %v295, %v298
    %307 = vset.pattern.permute.xlu0 1
    %308 = vperm.xlu0 %307, %v273
    %v309 = vpop.permute.xlu0 %308
    %311 = vset.pattern.permute.xlu0 1
    %312 = vperm.xlu0 %311, %v274
    %v313 = vpop.permute.xlu0 %312
    %315 = vset.pattern.permute.xlu0 1
    %316 = vperm.xlu0 %315, %v275
    %v317 = vpop.permute.xlu0 %316
    %319 = vset.pattern.permute.xlu0 1
    %320 = vperm.xlu0 %319, %v276
    %v321 = vpop.permute.xlu0 %320
    %v323 = vmul.f32 %v309, %v71
    %v324 = vmul.f32 %v309, %v72
    %v325 = vmul.f32 %v313, %v71
    %v326 = vmul.f32 %v313, %v72
    %v327 = vmul.f32 %v317, %v71
    %v328 = vmul.f32 %v317, %v72
    %v329 = vmul.f32 %v321, %v71
    %v330 = vmul.f32 %v321, %v72
    %v331 = vadd.f32 %v299, %v323
    %v332 = vadd.f32 %v300, %v324
    %v333 = vadd.f32 %v301, %v325
    %v334 = vadd.f32 %v302, %v326
    %v335 = vadd.f32 %v303, %v327
    %v336 = vadd.f32 %v304, %v328
    %v337 = vadd.f32 %v305, %v329
    %v338 = vadd.f32 %v306, %v330
    %339 = vset.pattern.permute.xlu0 2
    %340 = vperm.xlu0 %339, %v273
    %v341 = vpop.permute.xlu0 %340
    %343 = vset.pattern.permute.xlu0 2
    %344 = vperm.xlu0 %343, %v274
    %v345 = vpop.permute.xlu0 %344
    %347 = vset.pattern.permute.xlu0 2
    %348 = vperm.xlu0 %347, %v275
    %v349 = vpop.permute.xlu0 %348
    %351 = vset.pattern.permute.xlu0 2
    %352 = vperm.xlu0 %351, %v276
    %v353 = vpop.permute.xlu0 %352
    %v355 = vadd.f32 %v331, %v341
    %v356 = vadd.f32 %v332, %v341
    %v357 = vadd.f32 %v333, %v345
    %v358 = vadd.f32 %v334, %v345
    %v359 = vadd.f32 %v335, %v349
    %v360 = vadd.f32 %v336, %v349
    %v361 = vadd.f32 %v337, %v353
    %v362 = vadd.f32 %v338, %v353
    %v363 = vmax.f32 %v355, 0.0
    %v364 = vmax.f32 %v356, 0.0
    %v365 = vmax.f32 %v357, 0.0
    %v366 = vmax.f32 %v358, 0.0
    %v367 = vmax.f32 %v359, 0.0
    %v368 = vmax.f32 %v360, 0.0
    %v369 = vmax.f32 %v361, 0.0
    %v370 = vmax.f32 %v362, 0.0
    %s371 = scalar_lea.vmem %s1, 16
    %v372 = vld [vmem:[%s371] sm:$0xf]
    %v373 = vld [vmem:[%s371 + $0x4] sm:$0xf]
    %v374 = vld [vmem:[%s371 + $0x8] sm:$0xf]
    %v375 = vld [vmem:[%s371 + $0xc] sm:$0xf]
    %v376 = vpack.c.bf16 %v365, %v363
    %v377 = vpack.c.bf16 %v366, %v364
    %v378 = vpack.c.bf16 %v369, %v367
    %v379 = vpack.c.bf16 %v370, %v368
    %380 = vset.pattern.permute.xlu0 3
    %381 = vperm.xlu0 %380, %v273
    %v382 = vpop.permute.xlu0 %381
    %384 = vset.pattern.permute.xlu0 3
    %385 = vperm.xlu0 %384, %v274
    %v386 = vpop.permute.xlu0 %385
    %388 = vset.pattern.permute.xlu0 3
    %389 = vperm.xlu0 %388, %v275
    %v390 = vpop.permute.xlu0 %389
    %392 = vset.pattern.permute.xlu0 3
    %393 = vperm.xlu0 %392, %v276
    %v394 = vpop.permute.xlu0 %393
    %v400 = vunpack.c.l.b16 %v372
    %v401 = vunpack.c.l.b16 %v373
    %v402 = vunpack.c.l.b16 %v374
    %v403 = vunpack.c.l.b16 %v375
    %v404 = vpack.c.b16 %v401, %v400
    %v405 = vpack.c.b16 %v403, %v402
    %v407 = vsel %vm157, %v404, 0
    %v410 = vsel %vm157, %v405, 0
    %412 = vmatpush.bf16.msra.mxu0 0
    %413 = vmatpush.bf16.msra.mxu0 0
    %414 = vmatpush.bf16.msra.mxu0 0
    %415 = vmatpush.bf16.msra.mxu0 0
    %416 = vmatpush.bf16.msra.mxu0 0
    %417 = vmatpush.bf16.msra.mxu0 0
    %418 = vmatpush.bf16.msra.mxu0 %v378
    %419 = vmatpush.bf16.msra.mxu0 %v376
    %420 = vmatmul.bf16.gmra.mxu0 %v407
    %v421 = vpop.f32.mrf.mxu0
    %v422 = vadd.f32 %v382, %v421
    %v423 = vpop.f32.mrf.mxu0
    %v424 = vadd.f32 %v386, %v423
    %425 = vmatmul.bf16.gmra.mxu0 %v410
    %v426 = vpop.f32.mrf.mxu0
    %v427 = vadd.f32 %v390, %v426
    %v428 = vpop.f32.mrf.mxu0
    %v429 = vadd.f32 %v394, %v428
    %430 = vdwg.mxu0
    %431 = vmatpush.bf16.msra.mxu0 0
    %432 = vmatpush.bf16.msra.mxu0 0
    %433 = vmatpush.bf16.msra.mxu0 0
    %434 = vmatpush.bf16.msra.mxu0 0
    %435 = vmatpush.bf16.msra.mxu0 0
    %436 = vmatpush.bf16.msra.mxu0 0
    %437 = vmatpush.bf16.msra.mxu0 %v379
    %438 = vmatpush.bf16.msra.mxu0 %v377
    %439 = vmatmul.bf16.gmra.mxu0 %v407
    %v440 = vpop.f32.mrf.mxu0
    %v441 = vadd.f32 %v382, %v440
    %v442 = vpop.f32.mrf.mxu0
    %v443 = vadd.f32 %v386, %v442
    %444 = vmatmul.bf16.gmra.mxu0 %v410
    %v445 = vpop.f32.mrf.mxu0
    %v446 = vadd.f32 %v390, %v445
    %v447 = vpop.f32.mrf.mxu0
    %v448 = vadd.f32 %v394, %v447
    %449 = vdwg.mxu0
    %v450 = vmax.f32 %v422, 0.0
    %v451 = vmax.f32 %v441, 0.0
    %v452 = vmax.f32 %v424, 0.0
    %v453 = vmax.f32 %v443, 0.0
    %v454 = vmax.f32 %v427, 0.0
    %v455 = vmax.f32 %v446, 0.0
    %v456 = vmax.f32 %v429, 0.0
    %v457 = vmax.f32 %v448, 0.0
    %458 = vset.pattern.permute.xlu0 4
    %459 = vperm.xlu0 %458, %v273
    %v460 = vpop.permute.xlu0 %459
    %462 = vset.pattern.permute.xlu0 4
    %463 = vperm.xlu0 %462, %v274
    %v464 = vpop.permute.xlu0 %463
    %466 = vset.pattern.permute.xlu0 4
    %467 = vperm.xlu0 %466, %v275
    %v468 = vpop.permute.xlu0 %467
    %470 = vset.pattern.permute.xlu0 4
    %471 = vperm.xlu0 %470, %v276
    %v472 = vpop.permute.xlu0 %471
    %v474 = vmul.f32 %v460, %v450
    %v475 = vmul.f32 %v460, %v451
    %v476 = vmul.f32 %v464, %v452
    %v477 = vmul.f32 %v464, %v453
    %v478 = vmul.f32 %v468, %v454
    %v479 = vmul.f32 %v468, %v455
    %v480 = vmul.f32 %v472, %v456
    %v481 = vmul.f32 %v472, %v457
    %v482 = vadd.f32 %v474, %v476
    %v483 = vadd.f32 %v482, %v478
    %v484 = vadd.f32 %v483, %v480
    %v485 = vrot.slane %v484, 4
    %v486 = vadd.f32 %v484, %v485
    %v487 = vrot.slane %v486, 2
    %v488 = vadd.f32 %v486, %v487
    %v489 = vrot.slane %v488, 1
    %v490 = vadd.f32 %v488, %v489
    %v491 = vadd.f32 %v475, %v477
    %v492 = vadd.f32 %v491, %v479
    %v493 = vadd.f32 %v492, %v481
    %v494 = vrot.slane %v493, 4
    %v495 = vadd.f32 %v493, %v494
    %v496 = vrot.slane %v495, 2
    %v497 = vadd.f32 %v495, %v496
    %v498 = vrot.slane %v497, 1
    %v499 = vadd.f32 %v497, %v498
    %500 = vset.pattern.permute.xlu0 5
    %501 = vperm.xlu0 %500, %v273
    %v502 = vpop.permute.xlu0 %501
    %v504 = vadd.f32 %v490, %v502
    %v505 = vadd.f32 %v499, %v502
    %v506 = vadd.f32 %v270, %v504
    %v507 = vadd.f32 %v271, %v505
    %v508 = vsub.f32 0.0, %v506
    %v509 = vsub.f32 0.0, %v507
    %v510 = vmul.f32 %v508, 1.442695
    %v511 = vpow.pop %v510
    %v512 = vmul.f32 %v509, 1.442695
    %v513 = vpow.pop %v512
    %v514 = vadd.f32 %v511, 1.0
    %v515 = vadd.f32 %v513, 1.0
    %v516 = vrcp.pop %v514
    %v517 = vrcp.pop %v515
    %v518 = vmax.f32 %v516, 1e-05
    %v519 = vmax.f32 %v517, 1e-05
    %s520 = scalar_lea.vmem %s2, 64
    %v521 = vld [vmem:[%s520] sm:$0xff]
    %v522 = vld [vmem:[%s520 + $0x8] sm:$0xff]
    %v523 = vld [vmem:[%s520 + $0x10] sm:$0xff]
    %v524 = vld [vmem:[%s520 + $0x18] sm:$0xff]
    %526 = vset.pattern.permute.xlu0 0
    %527 = vperm.xlu0 %526, %v521
    %v528 = vpop.permute.xlu0 %527
    %531 = vset.pattern.permute.xlu0 0
    %532 = vperm.xlu0 %531, %v522
    %v533 = vpop.permute.xlu0 %532
    %536 = vset.pattern.permute.xlu0 0
    %537 = vperm.xlu0 %536, %v523
    %v538 = vpop.permute.xlu0 %537
    %541 = vset.pattern.permute.xlu0 0
    %542 = vperm.xlu0 %541, %v524
    %v543 = vpop.permute.xlu0 %542
    %v545 = vperm.slane %v518, 0
    %v546 = vperm.slane %v519, 0
    %v547 = vmul.f32 %v528, %v545
    %v548 = vmul.f32 %v528, %v546
    %v549 = vmul.f32 %v533, %v545
    %v550 = vmul.f32 %v533, %v546
    %v551 = vmul.f32 %v538, %v545
    %v552 = vmul.f32 %v538, %v546
    %v553 = vmul.f32 %v543, %v545
    %v554 = vmul.f32 %v543, %v546
    %555 = vset.pattern.permute.xlu0 1
    %556 = vperm.xlu0 %555, %v521
    %v557 = vpop.permute.xlu0 %556
    %559 = vset.pattern.permute.xlu0 1
    %560 = vperm.xlu0 %559, %v522
    %v561 = vpop.permute.xlu0 %560
    %563 = vset.pattern.permute.xlu0 1
    %564 = vperm.xlu0 %563, %v523
    %v565 = vpop.permute.xlu0 %564
    %567 = vset.pattern.permute.xlu0 1
    %568 = vperm.xlu0 %567, %v524
    %v569 = vpop.permute.xlu0 %568
    %v571 = vmul.f32 %v557, %v71
    %v572 = vmul.f32 %v557, %v72
    %v573 = vmul.f32 %v561, %v71
    %v574 = vmul.f32 %v561, %v72
    %v575 = vmul.f32 %v565, %v71
    %v576 = vmul.f32 %v565, %v72
    %v577 = vmul.f32 %v569, %v71
    %v578 = vmul.f32 %v569, %v72
    %v579 = vadd.f32 %v547, %v571
    %v580 = vadd.f32 %v548, %v572
    %v581 = vadd.f32 %v549, %v573
    %v582 = vadd.f32 %v550, %v574
    %v583 = vadd.f32 %v551, %v575
    %v584 = vadd.f32 %v552, %v576
    %v585 = vadd.f32 %v553, %v577
    %v586 = vadd.f32 %v554, %v578
    %587 = vset.pattern.permute.xlu0 2
    %588 = vperm.xlu0 %587, %v521
    %v589 = vpop.permute.xlu0 %588
    %591 = vset.pattern.permute.xlu0 2
    %592 = vperm.xlu0 %591, %v522
    %v593 = vpop.permute.xlu0 %592
    %595 = vset.pattern.permute.xlu0 2
    %596 = vperm.xlu0 %595, %v523
    %v597 = vpop.permute.xlu0 %596
    %599 = vset.pattern.permute.xlu0 2
    %600 = vperm.xlu0 %599, %v524
    %v601 = vpop.permute.xlu0 %600
    %v603 = vadd.f32 %v579, %v589
    %v604 = vadd.f32 %v580, %v589
    %v605 = vadd.f32 %v581, %v593
    %v606 = vadd.f32 %v582, %v593
    %v607 = vadd.f32 %v583, %v597
    %v608 = vadd.f32 %v584, %v597
    %v609 = vadd.f32 %v585, %v601
    %v610 = vadd.f32 %v586, %v601
    %v611 = vmax.f32 %v603, 0.0
    %v612 = vmax.f32 %v604, 0.0
    %v613 = vmax.f32 %v605, 0.0
    %v614 = vmax.f32 %v606, 0.0
    %v615 = vmax.f32 %v607, 0.0
    %v616 = vmax.f32 %v608, 0.0
    %v617 = vmax.f32 %v609, 0.0
    %v618 = vmax.f32 %v610, 0.0
    %s619 = scalar_lea.vmem %s1, 32
    %v620 = vld [vmem:[%s619] sm:$0xf]
    %v621 = vld [vmem:[%s619 + $0x4] sm:$0xf]
    %v622 = vld [vmem:[%s619 + $0x8] sm:$0xf]
    %v623 = vld [vmem:[%s619 + $0xc] sm:$0xf]
    %v624 = vpack.c.bf16 %v613, %v611
    %v625 = vpack.c.bf16 %v614, %v612
    %v626 = vpack.c.bf16 %v617, %v615
    %v627 = vpack.c.bf16 %v618, %v616
    %628 = vset.pattern.permute.xlu0 3
    %629 = vperm.xlu0 %628, %v521
    %v630 = vpop.permute.xlu0 %629
    %632 = vset.pattern.permute.xlu0 3
    %633 = vperm.xlu0 %632, %v522
    %v634 = vpop.permute.xlu0 %633
    %636 = vset.pattern.permute.xlu0 3
    %637 = vperm.xlu0 %636, %v523
    %v638 = vpop.permute.xlu0 %637
    %640 = vset.pattern.permute.xlu0 3
    %641 = vperm.xlu0 %640, %v524
    %v642 = vpop.permute.xlu0 %641
    %v648 = vunpack.c.l.b16 %v620
    %v649 = vunpack.c.l.b16 %v621
    %v650 = vunpack.c.l.b16 %v622
    %v651 = vunpack.c.l.b16 %v623
    %v652 = vpack.c.b16 %v649, %v648
    %v653 = vpack.c.b16 %v651, %v650
    %v655 = vsel %vm157, %v652, 0
    %v658 = vsel %vm157, %v653, 0
    %660 = vmatpush.bf16.msra.mxu0 0
    %661 = vmatpush.bf16.msra.mxu0 0
    %662 = vmatpush.bf16.msra.mxu0 0
    %663 = vmatpush.bf16.msra.mxu0 0
    %664 = vmatpush.bf16.msra.mxu0 0
    %665 = vmatpush.bf16.msra.mxu0 0
    %666 = vmatpush.bf16.msra.mxu0 %v626
    %667 = vmatpush.bf16.msra.mxu0 %v624
    %668 = vmatmul.bf16.gmra.mxu0 %v655
    %v669 = vpop.f32.mrf.mxu0
    %v670 = vadd.f32 %v630, %v669
    %v671 = vpop.f32.mrf.mxu0
    %v672 = vadd.f32 %v634, %v671
    %673 = vmatmul.bf16.gmra.mxu0 %v658
    %v674 = vpop.f32.mrf.mxu0
    %v675 = vadd.f32 %v638, %v674
    %v676 = vpop.f32.mrf.mxu0
    %v677 = vadd.f32 %v642, %v676
    %678 = vdwg.mxu0
    %679 = vmatpush.bf16.msra.mxu0 0
    %680 = vmatpush.bf16.msra.mxu0 0
    %681 = vmatpush.bf16.msra.mxu0 0
    %682 = vmatpush.bf16.msra.mxu0 0
    %683 = vmatpush.bf16.msra.mxu0 0
    %684 = vmatpush.bf16.msra.mxu0 0
    %685 = vmatpush.bf16.msra.mxu0 %v627
    %686 = vmatpush.bf16.msra.mxu0 %v625
    %687 = vmatmul.bf16.gmra.mxu0 %v655
    %v688 = vpop.f32.mrf.mxu0
    %v689 = vadd.f32 %v630, %v688
    %v690 = vpop.f32.mrf.mxu0
    %v691 = vadd.f32 %v634, %v690
    %692 = vmatmul.bf16.gmra.mxu0 %v658
    %v693 = vpop.f32.mrf.mxu0
    %v694 = vadd.f32 %v638, %v693
    %v695 = vpop.f32.mrf.mxu0
    %v696 = vadd.f32 %v642, %v695
    %697 = vdwg.mxu0
    %v698 = vmax.f32 %v670, 0.0
    %v699 = vmax.f32 %v689, 0.0
    %v700 = vmax.f32 %v672, 0.0
    %v701 = vmax.f32 %v691, 0.0
    %v702 = vmax.f32 %v675, 0.0
    %v703 = vmax.f32 %v694, 0.0
    %v704 = vmax.f32 %v677, 0.0
    %v705 = vmax.f32 %v696, 0.0
    %706 = vset.pattern.permute.xlu0 4
    %707 = vperm.xlu0 %706, %v521
    %v708 = vpop.permute.xlu0 %707
    %710 = vset.pattern.permute.xlu0 4
    %711 = vperm.xlu0 %710, %v522
    %v712 = vpop.permute.xlu0 %711
    %714 = vset.pattern.permute.xlu0 4
    %715 = vperm.xlu0 %714, %v523
    %v716 = vpop.permute.xlu0 %715
    %718 = vset.pattern.permute.xlu0 4
    %719 = vperm.xlu0 %718, %v524
    %v720 = vpop.permute.xlu0 %719
    %v722 = vmul.f32 %v708, %v698
    %v723 = vmul.f32 %v708, %v699
    %v724 = vmul.f32 %v712, %v700
    %v725 = vmul.f32 %v712, %v701
    %v726 = vmul.f32 %v716, %v702
    %v727 = vmul.f32 %v716, %v703
    %v728 = vmul.f32 %v720, %v704
    %v729 = vmul.f32 %v720, %v705
    %v730 = vadd.f32 %v722, %v724
    %v731 = vadd.f32 %v730, %v726
    %v732 = vadd.f32 %v731, %v728
    %v733 = vrot.slane %v732, 4
    %v734 = vadd.f32 %v732, %v733
    %v735 = vrot.slane %v734, 2
    %v736 = vadd.f32 %v734, %v735
    %v737 = vrot.slane %v736, 1
    %v738 = vadd.f32 %v736, %v737
    %v739 = vadd.f32 %v723, %v725
    %v740 = vadd.f32 %v739, %v727
    %v741 = vadd.f32 %v740, %v729
    %v742 = vrot.slane %v741, 4
    %v743 = vadd.f32 %v741, %v742
    %v744 = vrot.slane %v743, 2
    %v745 = vadd.f32 %v743, %v744
    %v746 = vrot.slane %v745, 1
    %v747 = vadd.f32 %v745, %v746
    %748 = vset.pattern.permute.xlu0 5
    %749 = vperm.xlu0 %748, %v521
    %v750 = vpop.permute.xlu0 %749
    %v752 = vadd.f32 %v738, %v750
    %v753 = vadd.f32 %v747, %v750
    %v754 = vadd.f32 %v518, %v752
    %v755 = vadd.f32 %v519, %v753
    %v756 = vsub.f32 0.0, %v754
    %v757 = vsub.f32 0.0, %v755
    %v758 = vmul.f32 %v756, 1.442695
    %v759 = vpow.pop %v758
    %v760 = vmul.f32 %v757, 1.442695
    %v761 = vpow.pop %v760
    %v762 = vadd.f32 %v759, 1.0
    %v763 = vadd.f32 %v761, 1.0
    %v764 = vrcp.pop %v762
    %v765 = vrcp.pop %v763
    %v766 = vmax.f32 %v764, 1e-05
    %v767 = vmax.f32 %v765, 1e-05
    %v770 = vrot.slane %v270, 7
    %v771 = vrot.slane %v271, 7
    %v776 = vrot.slane %v518, 6
    %v777 = vrot.slane %v519, 6
    %v782 = vrot.slane %v766, 5
    %v783 = vrot.slane %v767, 5
    %vm786 = vcmask 1040384
    %v787 = vsel %vm786, 0.0, %v770
    %v788 = vsel %vm786, 0.0, %v771
    %vm789 = vcmask 1041408
    %v790 = vsel %vm789, %v787, %v776
    %v791 = vsel %vm789, %v788, %v777
    %vm792 = vcmask 1042432
    %v793 = vsel %vm792, %v790, %v782
    %v794 = vsel %vm792, %v791, %v783
    %v795 = vsel %vm23, 1, 0
    %v796 = vsel %vm24, 1, 0
    %vm797 = vcmp.eq.s32.totalorder %v795, 1
    %vm798 = vcmp.eq.s32.totalorder %v796, 1
    %v799 = vsel %vm797, %v793, 0.0
    %v800 = vsel %vm798, %v794, 0.0
    %v803 = vrot.slane %v800, 4
    %vm804 = vcmask 1043456
    %v805 = vsel %vm804, %v799, %v803
    %807 = vst [vmem:[#allocation2] sm:$0xff] %v805
    // Predicated region
    $region14: #{tpu_custom_call.1} parent=1 // pred_check
      _
    $region15: #{tpu_custom_call.1} parent=1 // pred_check_branch
      %809 = sbr.rel (0) target = $region17
    $region16: #{tpu_custom_call.1} parent=1 // pred_region
      %811 = vsyncadd [#allocation3], 0
      %s813 = sshll.u32 [#allocation2], 4
      %s814 = int_to_ptr.vmem [resolvable:$true] %s813
      %s815 = sshll.u32 %s3, 4
      %s816 = int_to_ptr.hbm [resolvable:$true] %s815
      %818 = dma.vmem_to_hbm [thread:$0]  %s814, 128, %s816, [#allocation3]
    $region17: #{tpu_custom_call.1} parent=1 // pred_fallthru
      _
    // Predicated region
    $region18: #{tpu_custom_call.1} parent=1 // pred_check
      _
    $region19: #{tpu_custom_call.1} parent=1 // pred_check_branch
      %820 = sbr.rel (0) target = $region21
    $region20: #{tpu_custom_call.1} parent=1 // pred_region
      %822 = dma.done [#allocation3], 128
    $region21: #{tpu_custom_call.1} parent=1 // pred_fallthru
      _
    %823 = vsyncpa [#allocation3], 1

</llo_original>
